<compile_context>
chip_gen: v5e
topology: v5e:2x2
jax: 0.10.0
libtpu: 0.0.40
codegen_flags: <defaults>
</compile_context>

<pallas_src>
import functools

import jax
import jax.numpy as jnp
from jax.experimental import pallas as pl
from jax.experimental.pallas import tpu as pltpu


def _round_up(x, m):
    return pl.cdiv(x, m) * m


def _actor_kernel(state_ref, w1_ref, b1_ref, w2_ref, b2_ref, w3_ref, b3_ref,
                  out_ref, *, max_action):
    # Whole MLP hot path in one body: 3 MXU matmuls (bf16 operands, f32 acc)
    # + VPU bias/ReLU + EUP tanh, all elementwise math in f32.
    x = state_ref[...]

    h1 = jnp.dot(x, w1_ref[...], preferred_element_type=jnp.float32) + b1_ref[...]
    h1 = jnp.maximum(h1, 0.0)                                   # f32

    h2 = jnp.dot(h1.astype(w2_ref.dtype), w2_ref[...],
                 preferred_element_type=jnp.float32) + b2_ref[...]
    h2 = jnp.maximum(h2, 0.0)                                   # f32

    a = jnp.dot(h2.astype(w3_ref.dtype), w3_ref[...],
                preferred_element_type=jnp.float32) + b3_ref[...]
    out_ref[...] = (max_action * jnp.tanh(a)).astype(out_ref.dtype)


def actor_forward(state, params, max_action, *, batch_tile=128,
                  matmul_dtype=jnp.bfloat16):
    """Pallas TPU forward pass of the TD3 Actor.

    state:  [B, state_dim] float32
    params: dict with w1 [S,256], b1 [1,256], w2 [256,256], b2 [1,256],
            w3 [256,A], b3 [1,A]  (float32; matmul operands are cast to
            `matmul_dtype` here so the kernel DMAs the narrow payload).
    """
    B, S = state.shape
    H = params["w1"].shape[1]
    A = params["w3"].shape[1]

    # Lane-dense output: pad action dim up to a multiple of 128.
    A_pad = _round_up(A, 128)
    # No divisibility assert: pad the batch up to a whole number of tiles.
    B_pad = _round_up(B, batch_tile)
    grid = (B_pad // batch_tile,)           # (1,) for TD3-sized batches

    x = state.astype(matmul_dtype)
    if B_pad != B:
        x = jnp.pad(x, ((0, B_pad - B), (0, 0)))

    w1 = params["w1"].astype(matmul_dtype)
    w2 = params["w2"].astype(matmul_dtype)
    w3 = params["w3"].astype(matmul_dtype)
    b1 = params["b1"].astype(jnp.float32)
    b2 = params["b2"].astype(jnp.float32)
    b3 = params["b3"].astype(jnp.float32)
    if A_pad != A:
        w3 = jnp.pad(w3, ((0, 0), (0, A_pad - A)))
        b3 = jnp.pad(b3, ((0, 0), (0, A_pad - A)))

    # Batch tiled over the grid; weights/biases resident (constant index map).
    # NOTE: constant-index blocks are still double-buffered by default; that is
    # irrelevant at H=256 (~150 KB bf16 total) but consider
    # pipeline_mode=pl.Buffered(1) if hidden ever grows to multi-MB weights.
    in_specs = [
        pl.BlockSpec((batch_tile, S), lambda i: (i, 0)),   # state tile
        pl.BlockSpec((S, H), lambda i: (0, 0)),            # w1
        pl.BlockSpec((1, H), lambda i: (0, 0)),            # b1
        pl.BlockSpec((H, H), lambda i: (0, 0)),            # w2
        pl.BlockSpec((1, H), lambda i: (0, 0)),            # b2
        pl.BlockSpec((H, A_pad), lambda i: (0, 0)),        # w3 (lane-padded)
        pl.BlockSpec((1, A_pad), lambda i: (0, 0)),        # b3 (lane-padded)
    ]
    out_spec = pl.BlockSpec((batch_tile, A_pad), lambda i: (i, 0))

    itemsize = jnp.dtype(matmul_dtype).itemsize
    cost = pl.CostEstimate(
        flops=2 * B_pad * (S * H + H * H + H * A_pad),
        transcendentals=B_pad * A_pad,                     # tanh on the EUP
        bytes_accessed=(B_pad * S * itemsize
                        + (S * H + H * H + H * A_pad) * itemsize
                        + (H + H + A_pad) * 4
                        + B_pad * A_pad * 4),
    )

    kernel = functools.partial(_actor_kernel, max_action=float(max_action))

    out = pl.pallas_call(
        kernel,
        out_shape=jax.ShapeDtypeStruct((B_pad, A_pad), jnp.float32),
        grid_spec=pl.GridSpec(grid=grid, in_specs=in_specs, out_specs=out_spec),
        compiler_params=pltpu.CompilerParams(
            dimension_semantics=("parallel",),
        ),
        cost_estimate=cost,
    )(x, w1, b1, w2, b2, w3, b3)

    # TODO(synk): when called every rollout/training step, keep the ~150 KB of
    # bf16 weights VMEM-resident across calls (cross-pallas_call prefetch) or
    # fuse the actor into the surrounding step kernel instead of re-DMAing the
    # weights per invocation — that per-call fetch + launch overhead dominates
    # at these shapes.
    return out[:B, :A]


def init_actor_params(key, state_dim, action_dim, hidden=256):
    """Deterministic init mimicking nn.Linear default (uniform +/- 1/sqrt(fan_in))."""
    ks = jax.random.split(key, 6)

    def linear(kw, kb, fan_in, fan_out):
        bound = 1.0 / jnp.sqrt(fan_in)
        w = jax.random.uniform(kw, (fan_in, fan_out), jnp.float32, -bound, bound)
        b = jax.random.uniform(kb, (1, fan_out), jnp.float32, -bound, bound)
        return w, b

    w1, b1 = linear(ks[0], ks[1], state_dim, hidden)
    w2, b2 = linear(ks[2], ks[3], hidden, hidden)
    w3, b3 = linear(ks[4], ks[5], hidden, action_dim)
    return {"w1": w1, "b1": b1, "w2": w2, "b2": b2, "w3": w3, "b3": b3}


def actor_forward_ref(state, params, max_action, matmul_dtype=jnp.float32):
    """Pure-JAX reference with the same dtype policy as the kernel."""
    w1 = params["w1"].astype(matmul_dtype)
    w2 = params["w2"].astype(matmul_dtype)
    w3 = params["w3"].astype(matmul_dtype)
    h1 = jnp.maximum(
        jnp.dot(state.astype(matmul_dtype), w1,
                preferred_element_type=jnp.float32) + params["b1"], 0.0)
    h2 = jnp.maximum(
        jnp.dot(h1.astype(matmul_dtype), w2,
                preferred_element_type=jnp.float32) + params["b2"], 0.0)
    a = jnp.dot(h2.astype(matmul_dtype), w3,
                preferred_element_type=jnp.float32) + params["b3"]
    return max_action * jnp.tanh(a)


if __name__ == "__main__":
    key = jax.random.PRNGKey(0)
    k_state, k_params = jax.random.split(key)

    # TD3-like shapes: batch=128 states of dim 17 (e.g. HalfCheetah), 6-dim action.
    batch, state_dim, action_dim, max_action = 128, 17, 6, 2.0

    state = jax.random.normal(k_state, (batch, state_dim), dtype=jnp.float32)
    params = init_actor_params(k_params, state_dim, action_dim)

    ref_f32 = actor_forward_ref(state, params, max_action)

    # Full-f32 matmul path: tight match vs the f32 reference.
    out_f32 = jax.block_until_ready(
        actor_forward(state, params, max_action, matmul_dtype=jnp.float32))
    assert out_f32.shape == (batch, action_dim)
    assert jnp.allclose(out_f32, ref_f32, atol=1e-5, rtol=1e-5), "f32 mismatch"

    # Default bf16-operand path: tight vs a bf16-cast reference, loose vs pure f32.
    out_bf16 = jax.block_until_ready(actor_forward(state, params, max_action))
    ref_bf16 = actor_forward_ref(state, params, max_action, matmul_dtype=jnp.bfloat16)
    assert jnp.allclose(out_bf16, ref_bf16, atol=1e-3, rtol=1e-3), "bf16 mismatch"
    assert jnp.allclose(out_bf16, ref_f32, atol=1e-1, rtol=1e-1), "bf16 drifted"

    # Non-multiple batch exercises the pad/slice path (no divisibility assert).
    out_odd = jax.block_until_ready(actor_forward(state[:50], params, max_action))
    assert out_odd.shape == (50, action_dim)
    assert jnp.allclose(out_odd, ref_bf16[:50], atol=1e-3, rtol=1e-3), "tail mismatch"

    print("KERNEL_OK")
</pallas_src>

<mosaic_0001>
module attributes {stable_mosaic.version = 11 : i64} {
  func.func @_actor_kernel(%arg0: i32, %arg1: memref<128x17xf32, #tpu.memory_space<vmem>>, %arg2: memref<17x256xf32, #tpu.memory_space<vmem>>, %arg3: memref<1x256xf32, #tpu.memory_space<vmem>>, %arg4: memref<256x256xf32, #tpu.memory_space<vmem>>, %arg5: memref<1x256xf32, #tpu.memory_space<vmem>>, %arg6: memref<256x128xf32, #tpu.memory_space<vmem>>, %arg7: memref<1x128xf32, #tpu.memory_space<vmem>>, %arg8: memref<128x128xf32, #tpu.memory_space<vmem>>) attributes {dimension_semantics = [#tpu.dimension_semantics<parallel>], iteration_bounds = array<i64: 1>, scalar_prefetch = 0 : i64, scratch_operands = 0 : i64, tpu.core_type = #tpu.core_type<tc>, window_params = [{transform_indices = @transform_0, window_bounds = array<i64: 128, 17>}, {pipeline_mode = #tpu.pipeline_mode<synchronous>, transform_indices = @transform_1, window_bounds = array<i64: 17, 256>}, {pipeline_mode = #tpu.pipeline_mode<synchronous>, transform_indices = @transform_2, window_bounds = array<i64: 1, 256>}, {pipeline_mode = #tpu.pipeline_mode<synchronous>, transform_indices = @transform_3, window_bounds = array<i64: 256, 256>}, {pipeline_mode = #tpu.pipeline_mode<synchronous>, transform_indices = @transform_4, window_bounds = array<i64: 1, 256>}, {pipeline_mode = #tpu.pipeline_mode<synchronous>, transform_indices = @transform_5, window_bounds = array<i64: 256, 128>}, {pipeline_mode = #tpu.pipeline_mode<synchronous>, transform_indices = @transform_6, window_bounds = array<i64: 1, 128>}, {transform_indices = @transform_7, window_bounds = array<i64: 128, 128>}]} {
    %c0 = arith.constant 0 : index
    %c0_0 = arith.constant 0 : index
    %0 = vector.load %arg1[%c0, %c0_0] : memref<128x17xf32, #tpu.memory_space<vmem>>, vector<128x17xf32>
    %c0_1 = arith.constant 0 : index
    %c0_2 = arith.constant 0 : index
    %1 = vector.load %arg2[%c0_1, %c0_2] : memref<17x256xf32, #tpu.memory_space<vmem>>, vector<17x256xf32>
    %cst = arith.constant dense<0.000000e+00> : vector<128x256xf32>
    %2 = tpu.matmul %0, %1, %cst {dimension_numbers = #tpu.dot_dimension_numbers<[1], [0], [0], [1], [0, 0, 1, 1], [], []>} : vector<128x17xf32>, vector<17x256xf32>, vector<128x256xf32> -> vector<128x256xf32>
    %c0_3 = arith.constant 0 : index
    %c0_4 = arith.constant 0 : index
    %3 = vector.load %arg3[%c0_3, %c0_4] : memref<1x256xf32, #tpu.memory_space<vmem>>, vector<1x256xf32>
    %4 = vector.broadcast %3 : vector<1x256xf32> to vector<128x256xf32>
    %5 = arith.addf %2, %4 : vector<128x256xf32>
    %cst_5 = arith.constant 0.000000e+00 : f32
    %6 = vector.broadcast %cst_5 : f32 to vector<128x256xf32>
    %7 = arith.maximumf %5, %6 : vector<128x256xf32>
    %c0_6 = arith.constant 0 : index
    %c0_7 = arith.constant 0 : index
    %8 = vector.load %arg4[%c0_6, %c0_7] : memref<256x256xf32, #tpu.memory_space<vmem>>, vector<256x256xf32>
    %cst_8 = arith.constant dense<0.000000e+00> : vector<128x256xf32>
    %9 = tpu.matmul %7, %8, %cst_8 {dimension_numbers = #tpu.dot_dimension_numbers<[1], [0], [0], [1], [0, 0, 1, 1], [], []>} : vector<128x256xf32>, vector<256x256xf32>, vector<128x256xf32> -> vector<128x256xf32>
    %c0_9 = arith.constant 0 : index
    %c0_10 = arith.constant 0 : index
    %10 = vector.load %arg5[%c0_9, %c0_10] : memref<1x256xf32, #tpu.memory_space<vmem>>, vector<1x256xf32>
    %11 = vector.broadcast %10 : vector<1x256xf32> to vector<128x256xf32>
    %12 = arith.addf %9, %11 : vector<128x256xf32>
    %cst_11 = arith.constant 0.000000e+00 : f32
    %13 = vector.broadcast %cst_11 : f32 to vector<128x256xf32>
    %14 = arith.maximumf %12, %13 : vector<128x256xf32>
    %c0_12 = arith.constant 0 : index
    %c0_13 = arith.constant 0 : index
    %15 = vector.load %arg6[%c0_12, %c0_13] : memref<256x128xf32, #tpu.memory_space<vmem>>, vector<256x128xf32>
    %cst_14 = arith.constant dense<0.000000e+00> : vector<128x128xf32>
    %16 = tpu.matmul %14, %15, %cst_14 {dimension_numbers = #tpu.dot_dimension_numbers<[1], [0], [0], [1], [0, 0, 1, 1], [], []>} : vector<128x256xf32>, vector<256x128xf32>, vector<128x128xf32> -> vector<128x128xf32>
    %c0_15 = arith.constant 0 : index
    %c0_16 = arith.constant 0 : index
    %17 = vector.load %arg7[%c0_15, %c0_16] : memref<1x128xf32, #tpu.memory_space<vmem>>, vector<1x128xf32>
    %18 = vector.broadcast %17 : vector<1x128xf32> to vector<128x128xf32>
    %19 = arith.addf %16, %18 : vector<128x128xf32>
    %20 = math.tanh %19 : vector<128x128xf32>
    %cst_17 = arith.constant 2.000000e+00 : f32
    %21 = vector.broadcast %cst_17 : f32 to vector<128x128xf32>
    %22 = arith.mulf %21, %20 : vector<128x128xf32>
    %c0_18 = arith.constant 0 : index
    %c0_19 = arith.constant 0 : index
    %23 = vector.load %arg8[%c0_18, %c0_19] : memref<128x128xf32, #tpu.memory_space<vmem>>, vector<128x128xf32>
    tpu.vector_store %arg8[%c0_18, %c0_19], %22 {strides = array<i32>} : memref<128x128xf32, #tpu.memory_space<vmem>>, vector<128x128xf32>,
    return
  }
  func.func @transform_0(%arg0: i32) -> (i32, i32) {
    %c0_i32 = arith.constant 0 : i32
    %c0_i32_0 = arith.constant 0 : i32
    return %arg0, %c0_i32 : i32, i32
  }
  func.func @transform_1(%arg0: i32) -> (i32, i32) {
    %c0_i32 = arith.constant 0 : i32
    %c0_i32_0 = arith.constant 0 : i32
    %c0_i32_1 = arith.constant 0 : i32
    return %c0_i32, %c0_i32_0 : i32, i32
  }
  func.func @transform_2(%arg0: i32) -> (i32, i32) {
    %c0_i32 = arith.constant 0 : i32
    %c0_i32_0 = arith.constant 0 : i32
    %c0_i32_1 = arith.constant 0 : i32
    return %c0_i32, %c0_i32_0 : i32, i32
  }
  func.func @transform_3(%arg0: i32) -> (i32, i32) {
    %c0_i32 = arith.constant 0 : i32
    %c0_i32_0 = arith.constant 0 : i32
    %c0_i32_1 = arith.constant 0 : i32
    return %c0_i32, %c0_i32_0 : i32, i32
  }
  func.func @transform_4(%arg0: i32) -> (i32, i32) {
    %c0_i32 = arith.constant 0 : i32
    %c0_i32_0 = arith.constant 0 : i32
    %c0_i32_1 = arith.constant 0 : i32
    return %c0_i32, %c0_i32_0 : i32, i32
  }
  func.func @transform_5(%arg0: i32) -> (i32, i32) {
    %c0_i32 = arith.constant 0 : i32
    %c0_i32_0 = arith.constant 0 : i32
    %c0_i32_1 = arith.constant 0 : i32
    return %c0_i32, %c0_i32_0 : i32, i32
  }
  func.func @transform_6(%arg0: i32) -> (i32, i32) {
    %c0_i32 = arith.constant 0 : i32
    %c0_i32_0 = arith.constant 0 : i32
    %c0_i32_1 = arith.constant 0 : i32
    return %c0_i32, %c0_i32_0 : i32, i32
  }
  func.func @transform_7(%arg0: i32) -> (i32, i32) {
    %c0_i32 = arith.constant 0 : i32
    %c0_i32_0 = arith.constant 0 : i32
    return %arg0, %c0_i32 : i32, i32
  }
}

</mosaic_0001>

<llo_original>
// kernel: tpu_custom_call.1
$region0: #{tpu_custom_call.1}
  #allocation0 [shape = 'u32[]', space=smem, size = 0x4, offset = 0x4, fixed_abs, tag = 'smem constant byte address 0x4 - core index']
  #allocation1 [shape = 'u32[72,128]{1,0:T(1,128)}', space=vmem, size = 0x9000, scoped, tag = 'internal scratch']
  %s0 = inlined_call_operand.vmem [shape: f32[128,17], index: 0, kind: input, shape index: {}]
  %s1 = inlined_call_operand.vmem [shape: f32[17,256], index: 1, kind: input, shape index: {}]
  %s2 = inlined_call_operand.vmem [shape: f32[1,256], index: 2, kind: input, shape index: {}]
  %s3 = inlined_call_operand.hbm [shape: f32[256,256], index: 3, kind: input, shape index: {}]
  %s4 = inlined_call_operand.vmem [shape: f32[1,256], index: 4, kind: input, shape index: {}]
  %s5 = inlined_call_operand.hbm [shape: f32[256,128], index: 5, kind: input, shape index: {}]
  %s6 = inlined_call_operand.vmem [shape: f32[1,128], index: 6, kind: input, shape index: {}]
  %s7 = inlined_call_operand.hbm [shape: f32[128,128], index: 7, kind: output, shape index: {}]
  %s8 = sld [smem:[#allocation0]]
  $region46: #{tpu_custom_call.1} parent=0
    _
  %s10 = ssub.s32 1, %s8
  %s11 = scalar_select 0, %s10, %s8
  $region1: #{tpu_custom_call.1} parent=0
    #allocation2 [shape = 'u8[262144]{0}', space=vmem, size = 0x40000, scoped, tag = 'input window, operand 3, single buffered']
    #allocation3 [shape = 's32[1]{0}', space=sflag, size = 0x4, scoped, tag = 'scoped memory for tpu_custom_call.1']
    #allocation4 [shape = 's32[1]{0}', space=sflag, size = 0x4, scoped, tag = 'scoped memory for tpu_custom_call.1']
    #allocation5 [shape = 'u8[131072]{0}', space=vmem, size = 0x20000, scoped, tag = 'input window, operand 5, single buffered']
    #allocation6 [shape = 's32[1]{0}', space=sflag, size = 0x4, scoped, tag = 'scoped memory for tpu_custom_call.1']
    #allocation7 [shape = 'u8[65536]{0}', space=vmem, size = 0x10000, scoped, tag = 'output window, operand 0, single buffered']
    %12 = vsyncpa [#allocation3], 0
    %13 = vsyncpa [#allocation6], 0
    %14 = vsyncpa [#allocation4], 0
    // Predicated region
    $region2: #{tpu_custom_call.1} parent=1 // pred_check
      _
    $region3: #{tpu_custom_call.1} parent=1 // pred_check_branch
      %16 = sbr.rel (0) target = $region5
    $region4: #{tpu_custom_call.1} parent=1 // pred_region
      _
    $region5: #{tpu_custom_call.1} parent=1 // pred_fallthru
      _
    // Predicated region
    $region6: #{tpu_custom_call.1} parent=1 // pred_check
      _
    $region7: #{tpu_custom_call.1} parent=1 // pred_check_branch
      %18 = sbr.rel (0) target = $region9
    $region8: #{tpu_custom_call.1} parent=1 // pred_region
      _
    $region9: #{tpu_custom_call.1} parent=1 // pred_fallthru
      _
    // Predicated region
    $region10: #{tpu_custom_call.1} parent=1 // pred_check
      _
    $region11: #{tpu_custom_call.1} parent=1 // pred_check_branch
      %20 = sbr.rel (0) target = $region13
    $region12: #{tpu_custom_call.1} parent=1 // pred_region
      _
    $region13: #{tpu_custom_call.1} parent=1 // pred_fallthru
      _
    // Predicated region
    $region14: #{tpu_custom_call.1} parent=1 // pred_check
      _
    $region15: #{tpu_custom_call.1} parent=1 // pred_check_branch
      %22 = sbr.rel (0) target = $region17
    $region16: #{tpu_custom_call.1} parent=1 // pred_region
      %24 = vsyncadd [#allocation3], 0
      %s25 = sshll.u32 %s3, 4
      %s26 = int_to_ptr.hbm [resolvable:$true] %s25
      %s27 = sshll.u32 [#allocation2], 4
      %s28 = int_to_ptr.vmem [resolvable:$true] %s27
      %33 = dma.hbm_to_vmem [thread:$0]  %s26, 8192, %s28, [#allocation3], 256, 256, 16
    $region17: #{tpu_custom_call.1} parent=1 // pred_fallthru
      _
    // Predicated region
    $region18: #{tpu_custom_call.1} parent=1 // pred_check
      _
    $region19: #{tpu_custom_call.1} parent=1 // pred_check_branch
      %35 = sbr.rel (0) target = $region21
    $region20: #{tpu_custom_call.1} parent=1 // pred_region
      _
    $region21: #{tpu_custom_call.1} parent=1 // pred_fallthru
      _
    // Predicated region
    $region22: #{tpu_custom_call.1} parent=1 // pred_check
      _
    $region23: #{tpu_custom_call.1} parent=1 // pred_check_branch
      %37 = sbr.rel (0) target = $region25
    $region24: #{tpu_custom_call.1} parent=1 // pred_region
      %39 = vsyncadd [#allocation6], 0
      %s40 = sshll.u32 %s5, 4
      %s41 = int_to_ptr.hbm [resolvable:$true] %s40
      %s42 = sshll.u32 [#allocation5], 4
      %s43 = int_to_ptr.vmem [resolvable:$true] %s42
      %48 = dma.hbm_to_vmem [thread:$0]  %s41, 4096, %s43, [#allocation6], 128, 128, 8
    $region25: #{tpu_custom_call.1} parent=1 // pred_fallthru
      _
    // Predicated region
    $region26: #{tpu_custom_call.1} parent=1 // pred_check
      _
    $region27: #{tpu_custom_call.1} parent=1 // pred_check_branch
      %50 = sbr.rel (0) target = $region29
    $region28: #{tpu_custom_call.1} parent=1 // pred_region
      _
    $region29: #{tpu_custom_call.1} parent=1 // pred_fallthru
      _
    // Predicated region
    $region30: #{tpu_custom_call.1} parent=1 // pred_check
      _
    $region31: #{tpu_custom_call.1} parent=1 // pred_check_branch
      %52 = sbr.rel (0) target = $region33
    $region32: #{tpu_custom_call.1} parent=1 // pred_region
      %54 = dma.done [#allocation3], 8192
    $region33: #{tpu_custom_call.1} parent=1 // pred_fallthru
      _
    // Predicated region
    $region34: #{tpu_custom_call.1} parent=1 // pred_check
      _
    $region35: #{tpu_custom_call.1} parent=1 // pred_check_branch
      %56 = sbr.rel (0) target = $region37
    $region36: #{tpu_custom_call.1} parent=1 // pred_region
      %58 = dma.done [#allocation6], 4096
    $region37: #{tpu_custom_call.1} parent=1 // pred_fallthru
      _
    %v59 = vld [vmem:[%s0] sm:$0xff]
    %v60 = vld [vmem:[%s0 + $0x8] sm:$0xff]
    %v61 = vld [vmem:[%s0 + $0x10] sm:$0xff]
    %v62 = vld [vmem:[%s0 + $0x18] sm:$0xff]
    %v63 = vld [vmem:[%s0 + $0x20] sm:$0xff]
    %v64 = vld [vmem:[%s0 + $0x28] sm:$0xff]
    %v65 = vld [vmem:[%s0 + $0x30] sm:$0xff]
    %v66 = vld [vmem:[%s0 + $0x38] sm:$0xff]
    %v67 = vld [vmem:[%s0 + $0x40] sm:$0xff]
    %v68 = vld [vmem:[%s0 + $0x48] sm:$0xff]
    %v69 = vld [vmem:[%s0 + $0x50] sm:$0xff]
    %v70 = vld [vmem:[%s0 + $0x58] sm:$0xff]
    %v71 = vld [vmem:[%s0 + $0x60] sm:$0xff]
    %v72 = vld [vmem:[%s0 + $0x68] sm:$0xff]
    %v73 = vld [vmem:[%s0 + $0x70] sm:$0xff]
    %v74 = vld [vmem:[%s0 + $0x78] sm:$0xff]
    %v75 = vld [vmem:[%s1] sm:$0xff]
    %v76 = vld [vmem:[%s1 + $0x8] sm:$0xff]
    %v77 = vld [vmem:[%s1 + $0x10] sm:$0xff]
    %v78 = vld [vmem:[%s1 + $0x18] sm:$0xff]
    %v79 = vld [vmem:[%s1 + $0x20] sm:$0x1]
    %v80 = vld [vmem:[%s1 + $0x28] sm:$0x1]
    %v81 = vld [vmem:[%s2] sm:$0x3]
    %v83 = vperm.slane %v81, 0
    %v84 = vperm.slane %v81, 1
    %vm87 = vcmask 138240
    %v89 = vsel %vm87, %v59, 0
    %v92 = vsel %vm87, %v60, 0
    %v95 = vsel %vm87, %v61, 0
    %v98 = vsel %vm87, %v62, 0
    %v101 = vsel %vm87, %v63, 0
    %v104 = vsel %vm87, %v64, 0
    %v107 = vsel %vm87, %v65, 0
    %v110 = vsel %vm87, %v66, 0
    %v113 = vsel %vm87, %v67, 0
    %v116 = vsel %vm87, %v68, 0
    %v119 = vsel %vm87, %v69, 0
    %v122 = vsel %vm87, %v70, 0
    %v125 = vsel %vm87, %v71, 0
    %v128 = vsel %vm87, %v72, 0
    %v131 = vsel %vm87, %v73, 0
    %v134 = vsel %vm87, %v74, 0
    %vm136 = vcmask 1040384
    %v138 = vsel %vm136, %v79, 0
    %v141 = vsel %vm136, %v80, 0
    %143 = vmatpush.msra.mxu0 0.0
    %144 = vmatpush.msra.mxu0 0.0
    %145 = vmatpush.msra.mxu0 0.0
    %146 = vmatpush.msra.mxu0 0.0
    %147 = vmatpush.msra.mxu0 0.0
    %148 = vmatpush.msra.mxu0 0.0
    %149 = vmatpush.msra.mxu0 0.0
    %150 = vmatpush.msra.mxu0 0.0
    %151 = vmatpush.msra.mxu0 0.0
    %152 = vmatpush.msra.mxu0 0.0
    %153 = vmatpush.msra.mxu0 0.0
    %154 = vmatpush.msra.mxu0 0.0
    %155 = vmatpush.msra.mxu0 0.0
    %156 = vmatpush.msra.mxu0 %v138
    %157 = vmatpush.msra.mxu0 %v77
    %158 = vmatpush.msra.mxu0 %v75
    %159 = vmatmul.f32.gmra.mxu0 %v89
    %v160 = vpop.f32.mrf.mxu0
    %v161 = vadd.f32 %v83, %v160
    %162 = vmatmul.f32.gmra.mxu0 %v92
    %v163 = vpop.f32.mrf.mxu0
    %v164 = vadd.f32 %v83, %v163
    %165 = vmatmul.f32.gmra.mxu0 %v95
    %v166 = vpop.f32.mrf.mxu0
    %v167 = vadd.f32 %v83, %v166
    %168 = vmatmul.f32.gmra.mxu0 %v98
    %v169 = vpop.f32.mrf.mxu0
    %v170 = vadd.f32 %v83, %v169
    %171 = vmatmul.f32.gmra.mxu0 %v101
    %v172 = vpop.f32.mrf.mxu0
    %v173 = vadd.f32 %v83, %v172
    %174 = vmatmul.f32.gmra.mxu0 %v104
    %v175 = vpop.f32.mrf.mxu0
    %v176 = vadd.f32 %v83, %v175
    %177 = vmatmul.f32.gmra.mxu0 %v107
    %v178 = vpop.f32.mrf.mxu0
    %v179 = vadd.f32 %v83, %v178
    %180 = vmatmul.f32.gmra.mxu0 %v110
    %v181 = vpop.f32.mrf.mxu0
    %v182 = vadd.f32 %v83, %v181
    %183 = vmatmul.f32.gmra.mxu0 %v113
    %v184 = vpop.f32.mrf.mxu0
    %v185 = vadd.f32 %v83, %v184
    %186 = vmatmul.f32.gmra.mxu0 %v116
    %v187 = vpop.f32.mrf.mxu0
    %v188 = vadd.f32 %v83, %v187
    %189 = vmatmul.f32.gmra.mxu0 %v119
    %v190 = vpop.f32.mrf.mxu0
    %v191 = vadd.f32 %v83, %v190
    %192 = vmatmul.f32.gmra.mxu0 %v122
    %v193 = vpop.f32.mrf.mxu0
    %v194 = vadd.f32 %v83, %v193
    %195 = vmatmul.f32.gmra.mxu0 %v125
    %v196 = vpop.f32.mrf.mxu0
    %v197 = vadd.f32 %v83, %v196
    %198 = vmatmul.f32.gmra.mxu0 %v128
    %v199 = vpop.f32.mrf.mxu0
    %v200 = vadd.f32 %v83, %v199
    %201 = vmatmul.f32.gmra.mxu0 %v131
    %v202 = vpop.f32.mrf.mxu0
    %v203 = vadd.f32 %v83, %v202
    %204 = vmatmul.f32.gmra.mxu0 %v134
    %v205 = vpop.f32.mrf.mxu0
    %v206 = vadd.f32 %v83, %v205
    %207 = vdwg.mxu0
    %208 = vmatpush.msra.mxu0 0.0
    %209 = vmatpush.msra.mxu0 0.0
    %210 = vmatpush.msra.mxu0 0.0
    %211 = vmatpush.msra.mxu0 0.0
    %212 = vmatpush.msra.mxu0 0.0
    %213 = vmatpush.msra.mxu0 0.0
    %214 = vmatpush.msra.mxu0 0.0
    %215 = vmatpush.msra.mxu0 0.0
    %216 = vmatpush.msra.mxu0 0.0
    %217 = vmatpush.msra.mxu0 0.0
    %218 = vmatpush.msra.mxu0 0.0
    %219 = vmatpush.msra.mxu0 0.0
    %220 = vmatpush.msra.mxu0 0.0
    %221 = vmatpush.msra.mxu0 %v141
    %222 = vmatpush.msra.mxu0 %v78
    %223 = vmatpush.msra.mxu0 %v76
    %224 = vmatmul.f32.gmra.mxu0 %v89
    %v225 = vpop.f32.mrf.mxu0
    %v226 = vadd.f32 %v84, %v225
    %227 = vmatmul.f32.gmra.mxu0 %v92
    %v228 = vpop.f32.mrf.mxu0
    %v229 = vadd.f32 %v84, %v228
    %230 = vmatmul.f32.gmra.mxu0 %v95
    %v231 = vpop.f32.mrf.mxu0
    %v232 = vadd.f32 %v84, %v231
    %233 = vmatmul.f32.gmra.mxu0 %v98
    %v234 = vpop.f32.mrf.mxu0
    %v235 = vadd.f32 %v84, %v234
    %236 = vmatmul.f32.gmra.mxu0 %v101
    %v237 = vpop.f32.mrf.mxu0
    %v238 = vadd.f32 %v84, %v237
    %239 = vmatmul.f32.gmra.mxu0 %v104
    %v240 = vpop.f32.mrf.mxu0
    %v241 = vadd.f32 %v84, %v240
    %242 = vmatmul.f32.gmra.mxu0 %v107
    %v243 = vpop.f32.mrf.mxu0
    %v244 = vadd.f32 %v84, %v243
    %245 = vmatmul.f32.gmra.mxu0 %v110
    %v246 = vpop.f32.mrf.mxu0
    %v247 = vadd.f32 %v84, %v246
    %248 = vmatmul.f32.gmra.mxu0 %v113
    %v249 = vpop.f32.mrf.mxu0
    %v250 = vadd.f32 %v84, %v249
    %251 = vmatmul.f32.gmra.mxu0 %v116
    %v252 = vpop.f32.mrf.mxu0
    %v253 = vadd.f32 %v84, %v252
    %254 = vmatmul.f32.gmra.mxu0 %v119
    %v255 = vpop.f32.mrf.mxu0
    %v256 = vadd.f32 %v84, %v255
    %257 = vmatmul.f32.gmra.mxu0 %v122
    %v258 = vpop.f32.mrf.mxu0
    %v259 = vadd.f32 %v84, %v258
    %260 = vmatmul.f32.gmra.mxu0 %v125
    %v261 = vpop.f32.mrf.mxu0
    %v262 = vadd.f32 %v84, %v261
    %263 = vmatmul.f32.gmra.mxu0 %v128
    %v264 = vpop.f32.mrf.mxu0
    %v265 = vadd.f32 %v84, %v264
    %266 = vmatmul.f32.gmra.mxu0 %v131
    %v267 = vpop.f32.mrf.mxu0
    %v268 = vadd.f32 %v84, %v267
    %269 = vmatmul.f32.gmra.mxu0 %v134
    %v270 = vpop.f32.mrf.mxu0
    %v271 = vadd.f32 %v84, %v270
    %272 = vdwg.mxu0
    %v273 = vmax.f32 %v161, 0.0
    %v274 = vmax.f32 %v226, 0.0
    %v275 = vmax.f32 %v164, 0.0
    %v276 = vmax.f32 %v229, 0.0
    %v277 = vmax.f32 %v167, 0.0
    %v278 = vmax.f32 %v232, 0.0
    %v279 = vmax.f32 %v170, 0.0
    %v280 = vmax.f32 %v235, 0.0
    %v281 = vmax.f32 %v173, 0.0
    %v282 = vmax.f32 %v238, 0.0
    %v283 = vmax.f32 %v176, 0.0
    %v284 = vmax.f32 %v241, 0.0
    %v285 = vmax.f32 %v179, 0.0
    %v286 = vmax.f32 %v244, 0.0
    %v287 = vmax.f32 %v182, 0.0
    %v288 = vmax.f32 %v247, 0.0
    %v289 = vmax.f32 %v185, 0.0
    %v290 = vmax.f32 %v250, 0.0
    %v291 = vmax.f32 %v188, 0.0
    %v292 = vmax.f32 %v253, 0.0
    %v293 = vmax.f32 %v191, 0.0
    %v294 = vmax.f32 %v256, 0.0
    %v295 = vmax.f32 %v194, 0.0
    %v296 = vmax.f32 %v259, 0.0
    %v297 = vmax.f32 %v197, 0.0
    %v298 = vmax.f32 %v262, 0.0
    %v299 = vmax.f32 %v200, 0.0
    %v300 = vmax.f32 %v265, 0.0
    %v301 = vmax.f32 %v203, 0.0
    %v302 = vmax.f32 %v268, 0.0
    %v303 = vmax.f32 %v206, 0.0
    %v304 = vmax.f32 %v271, 0.0
    %v305 = vld [vmem:[#allocation2] sm:$0xff]
    %v306 = vld [vmem:[#allocation2 + $0x8] sm:$0xff]
    %v307 = vld [vmem:[#allocation2 + $0x10] sm:$0xff]
    %v308 = vld [vmem:[#allocation2 + $0x18] sm:$0xff]
    %v309 = vld [vmem:[#allocation2 + $0x20] sm:$0xff]
    %v310 = vld [vmem:[#allocation2 + $0x28] sm:$0xff]
    %v311 = vld [vmem:[#allocation2 + $0x30] sm:$0xff]
    %v312 = vld [vmem:[#allocation2 + $0x38] sm:$0xff]
    %v313 = vld [vmem:[#allocation2 + $0x40] sm:$0xff]
    %v314 = vld [vmem:[#allocation2 + $0x48] sm:$0xff]
    %v315 = vld [vmem:[#allocation2 + $0x50] sm:$0xff]
    %v316 = vld [vmem:[#allocation2 + $0x58] sm:$0xff]
    %v317 = vld [vmem:[#allocation2 + $0x60] sm:$0xff]
    %v318 = vld [vmem:[#allocation2 + $0x68] sm:$0xff]
    %v319 = vld [vmem:[#allocation2 + $0x70] sm:$0xff]
    %v320 = vld [vmem:[#allocation2 + $0x78] sm:$0xff]
    %v321 = vld [vmem:[#allocation2 + $0x80] sm:$0xff]
    %v322 = vld [vmem:[#allocation2 + $0x88] sm:$0xff]
    %v323 = vld [vmem:[#allocation2 + $0x90] sm:$0xff]
    %v324 = vld [vmem:[#allocation2 + $0x98] sm:$0xff]
    %v325 = vld [vmem:[#allocation2 + $0xa0] sm:$0xff]
    %v326 = vld [vmem:[#allocation2 + $0xa8] sm:$0xff]
    %v327 = vld [vmem:[#allocation2 + $0xb0] sm:$0xff]
    %v328 = vld [vmem:[#allocation2 + $0xb8] sm:$0xff]
    %v329 = vld [vmem:[#allocation2 + $0xc0] sm:$0xff]
    %v330 = vld [vmem:[#allocation2 + $0xc8] sm:$0xff]
    %v331 = vld [vmem:[#allocation2 + $0xd0] sm:$0xff]
    %v332 = vld [vmem:[#allocation2 + $0xd8] sm:$0xff]
    %v333 = vld [vmem:[#allocation2 + $0xe0] sm:$0xff]
    %v334 = vld [vmem:[#allocation2 + $0xe8] sm:$0xff]
    %v335 = vld [vmem:[#allocation2 + $0xf0] sm:$0xff]
    %v336 = vld [vmem:[#allocation2 + $0xf8] sm:$0xff]
    %v337 = vld [vmem:[#allocation2 + $0x100] sm:$0xff]
    %v338 = vld [vmem:[#allocation2 + $0x108] sm:$0xff]
    %v339 = vld [vmem:[#allocation2 + $0x110] sm:$0xff]
    %v340 = vld [vmem:[#allocation2 + $0x118] sm:$0xff]
    %v341 = vld [vmem:[#allocation2 + $0x120] sm:$0xff]
    %v342 = vld [vmem:[#allocation2 + $0x128] sm:$0xff]
    %v343 = vld [vmem:[#allocation2 + $0x130] sm:$0xff]
    %v344 = vld [vmem:[#allocation2 + $0x138] sm:$0xff]
    %v345 = vld [vmem:[#allocation2 + $0x140] sm:$0xff]
    %v346 = vld [vmem:[#allocation2 + $0x148] sm:$0xff]
    %v347 = vld [vmem:[#allocation2 + $0x150] sm:$0xff]
    %v348 = vld [vmem:[#allocation2 + $0x158] sm:$0xff]
    %v349 = vld [vmem:[#allocation2 + $0x160] sm:$0xff]
    %v350 = vld [vmem:[#allocation2 + $0x168] sm:$0xff]
    %v351 = vld [vmem:[#allocation2 + $0x170] sm:$0xff]
    %v352 = vld [vmem:[#allocation2 + $0x178] sm:$0xff]
    %v353 = vld [vmem:[#allocation2 + $0x180] sm:$0xff]
    %v354 = vld [vmem:[#allocation2 + $0x188] sm:$0xff]
    %v355 = vld [vmem:[#allocation2 + $0x190] sm:$0xff]
    %v356 = vld [vmem:[#allocation2 + $0x198] sm:$0xff]
    %v357 = vld [vmem:[#allocation2 + $0x1a0] sm:$0xff]
    %v358 = vld [vmem:[#allocation2 + $0x1a8] sm:$0xff]
    %v359 = vld [vmem:[#allocation2 + $0x1b0] sm:$0xff]
    %v360 = vld [vmem:[#allocation2 + $0x1b8] sm:$0xff]
    %v361 = vld [vmem:[#allocation2 + $0x1c0] sm:$0xff]
    %v362 = vld [vmem:[#allocation2 + $0x1c8] sm:$0xff]
    %v363 = vld [vmem:[#allocation2 + $0x1d0] sm:$0xff]
    %v364 = vld [vmem:[#allocation2 + $0x1d8] sm:$0xff]
    %v365 = vld [vmem:[#allocation2 + $0x1e0] sm:$0xff]
    %v366 = vld [vmem:[#allocation2 + $0x1e8] sm:$0xff]
    %v367 = vld [vmem:[#allocation2 + $0x1f0] sm:$0xff]
    %v368 = vld [vmem:[#allocation2 + $0x1f8] sm:$0xff]
    %v369 = vld [vmem:[%s4] sm:$0x3]
    %v371 = vperm.slane %v369, 0
    %v372 = vperm.slane %v369, 1
    %375 = vmatpush.msra.mxu0 %v335
    %376 = vmatpush.msra.mxu0 %v333
    %377 = vmatpush.msra.mxu0 %v331
    %378 = vmatpush.msra.mxu0 %v329
    %379 = vmatpush.msra.mxu0 %v327
    %380 = vmatpush.msra.mxu0 %v325
    %381 = vmatpush.msra.mxu0 %v323
    %382 = vmatpush.msra.mxu0 %v321
    %383 = vmatpush.msra.mxu0 %v319
    %384 = vmatpush.msra.mxu0 %v317
    %385 = vmatpush.msra.mxu0 %v315
    %386 = vmatpush.msra.mxu0 %v313
    %387 = vmatpush.msra.mxu0 %v311
    %388 = vmatpush.msra.mxu0 %v309
    %389 = vmatpush.msra.mxu0 %v307
    %390 = vmatpush.msra.mxu0 %v305
    %391 = vmatmul.f32.gmra.mxu0 %v273
    %v392 = vpop.f32.mrf.mxu0
    %v393 = vadd.f32 %v371, %v392
    %394 = vmatmul.f32.gmra.mxu0 %v275
    %v395 = vpop.f32.mrf.mxu0
    %v396 = vadd.f32 %v371, %v395
    %397 = vmatmul.f32.gmra.mxu0 %v277
    %v398 = vpop.f32.mrf.mxu0
    %v399 = vadd.f32 %v371, %v398
    %400 = vmatmul.f32.gmra.mxu0 %v279
    %v401 = vpop.f32.mrf.mxu0
    %v402 = vadd.f32 %v371, %v401
    %403 = vmatmul.f32.gmra.mxu0 %v281
    %v404 = vpop.f32.mrf.mxu0
    %v405 = vadd.f32 %v371, %v404
    %406 = vmatmul.f32.gmra.mxu0 %v283
    %v407 = vpop.f32.mrf.mxu0
    %v408 = vadd.f32 %v371, %v407
    %409 = vmatmul.f32.gmra.mxu0 %v285
    %v410 = vpop.f32.mrf.mxu0
    %v411 = vadd.f32 %v371, %v410
    %412 = vmatmul.f32.gmra.mxu0 %v287
    %v413 = vpop.f32.mrf.mxu0
    %v414 = vadd.f32 %v371, %v413
    %415 = vmatmul.f32.gmra.mxu0 %v289
    %v416 = vpop.f32.mrf.mxu0
    %v417 = vadd.f32 %v371, %v416
    %418 = vmatmul.f32.gmra.mxu0 %v291
    %v419 = vpop.f32.mrf.mxu0
    %v420 = vadd.f32 %v371, %v419
    %421 = vmatmul.f32.gmra.mxu0 %v293
    %v422 = vpop.f32.mrf.mxu0
    %v423 = vadd.f32 %v371, %v422
    %424 = vmatmul.f32.gmra.mxu0 %v295
    %v425 = vpop.f32.mrf.mxu0
    %v426 = vadd.f32 %v371, %v425
    %427 = vmatmul.f32.gmra.mxu0 %v297
    %v428 = vpop.f32.mrf.mxu0
    %v429 = vadd.f32 %v371, %v428
    %430 = vmatmul.f32.gmra.mxu0 %v299
    %v431 = vpop.f32.mrf.mxu0
    %v432 = vadd.f32 %v371, %v431
    %433 = vmatmul.f32.gmra.mxu0 %v301
    %v434 = vpop.f32.mrf.mxu0
    %v435 = vadd.f32 %v371, %v434
    %436 = vmatmul.f32.gmra.mxu0 %v303
    %v437 = vpop.f32.mrf.mxu0
    %v438 = vadd.f32 %v371, %v437
    %439 = vdwg.mxu0
    %440 = vmatpush.msra.mxu0 %v367
    %441 = vmatpush.msra.mxu0 %v365
    %442 = vmatpush.msra.mxu0 %v363
    %443 = vmatpush.msra.mxu0 %v361
    %444 = vmatpush.msra.mxu0 %v359
    %445 = vmatpush.msra.mxu0 %v357
    %446 = vmatpush.msra.mxu0 %v355
    %447 = vmatpush.msra.mxu0 %v353
    %448 = vmatpush.msra.mxu0 %v351
    %449 = vmatpush.msra.mxu0 %v349
    %450 = vmatpush.msra.mxu0 %v347
    %451 = vmatpush.msra.mxu0 %v345
    %452 = vmatpush.msra.mxu0 %v343
    %453 = vmatpush.msra.mxu0 %v341
    %454 = vmatpush.msra.mxu0 %v339
    %455 = vmatpush.msra.mxu0 %v337
    %456 = vmatmul.f32.gmra.mxu0 %v274
    %v457 = vpop.f32.mrf.mxu0
    %v458 = vadd.f32 %v393, %v457
    %459 = vmatmul.f32.gmra.mxu0 %v276
    %v460 = vpop.f32.mrf.mxu0
    %v461 = vadd.f32 %v396, %v460
    %462 = vmatmul.f32.gmra.mxu0 %v278
    %v463 = vpop.f32.mrf.mxu0
    %v464 = vadd.f32 %v399, %v463
    %465 = vmatmul.f32.gmra.mxu0 %v280
    %v466 = vpop.f32.mrf.mxu0
    %v467 = vadd.f32 %v402, %v466
    %468 = vmatmul.f32.gmra.mxu0 %v282
    %v469 = vpop.f32.mrf.mxu0
    %v470 = vadd.f32 %v405, %v469
    %471 = vmatmul.f32.gmra.mxu0 %v284
    %v472 = vpop.f32.mrf.mxu0
    %v473 = vadd.f32 %v408, %v472
    %474 = vmatmul.f32.gmra.mxu0 %v286
    %v475 = vpop.f32.mrf.mxu0
    %v476 = vadd.f32 %v411, %v475
    %477 = vmatmul.f32.gmra.mxu0 %v288
    %v478 = vpop.f32.mrf.mxu0
    %v479 = vadd.f32 %v414, %v478
    %480 = vmatmul.f32.gmra.mxu0 %v290
    %v481 = vpop.f32.mrf.mxu0
    %v482 = vadd.f32 %v417, %v481
    %483 = vmatmul.f32.gmra.mxu0 %v292
    %v484 = vpop.f32.mrf.mxu0
    %v485 = vadd.f32 %v420, %v484
    %486 = vmatmul.f32.gmra.mxu0 %v294
    %v487 = vpop.f32.mrf.mxu0
    %v488 = vadd.f32 %v423, %v487
    %489 = vmatmul.f32.gmra.mxu0 %v296
    %v490 = vpop.f32.mrf.mxu0
    %v491 = vadd.f32 %v426, %v490
    %492 = vmatmul.f32.gmra.mxu0 %v298
    %v493 = vpop.f32.mrf.mxu0
    %v494 = vadd.f32 %v429, %v493
    %495 = vmatmul.f32.gmra.mxu0 %v300
    %v496 = vpop.f32.mrf.mxu0
    %v497 = vadd.f32 %v432, %v496
    %498 = vmatmul.f32.gmra.mxu0 %v302
    %v499 = vpop.f32.mrf.mxu0
    %v500 = vadd.f32 %v435, %v499
    %501 = vmatmul.f32.gmra.mxu0 %v304
    %v502 = vpop.f32.mrf.mxu0
    %v503 = vadd.f32 %v438, %v502
    %504 = vdwg.mxu0
    %505 = vmatpush.msra.mxu0 %v336
    %506 = vmatpush.msra.mxu0 %v334
    %507 = vmatpush.msra.mxu0 %v332
    %508 = vmatpush.msra.mxu0 %v330
    %509 = vmatpush.msra.mxu0 %v328
    %510 = vmatpush.msra.mxu0 %v326
    %511 = vmatpush.msra.mxu0 %v324
    %512 = vmatpush.msra.mxu0 %v322
    %513 = vmatpush.msra.mxu0 %v320
    %514 = vmatpush.msra.mxu0 %v318
    %515 = vmatpush.msra.mxu0 %v316
    %516 = vmatpush.msra.mxu0 %v314
    %517 = vmatpush.msra.mxu0 %v312
    %518 = vmatpush.msra.mxu0 %v310
    %519 = vmatpush.msra.mxu0 %v308
    %520 = vmatpush.msra.mxu0 %v306
    %521 = vmatmul.f32.gmra.mxu0 %v273
    %v522 = vpop.f32.mrf.mxu0
    %v523 = vadd.f32 %v372, %v522
    %524 = vmatmul.f32.gmra.mxu0 %v275
    %v525 = vpop.f32.mrf.mxu0
    %v526 = vadd.f32 %v372, %v525
    %527 = vmatmul.f32.gmra.mxu0 %v277
    %v528 = vpop.f32.mrf.mxu0
    %v529 = vadd.f32 %v372, %v528
    %530 = vmatmul.f32.gmra.mxu0 %v279
    %v531 = vpop.f32.mrf.mxu0
    %v532 = vadd.f32 %v372, %v531
    %533 = vmatmul.f32.gmra.mxu0 %v281
    %v534 = vpop.f32.mrf.mxu0
    %v535 = vadd.f32 %v372, %v534
    %536 = vmatmul.f32.gmra.mxu0 %v283
    %v537 = vpop.f32.mrf.mxu0
    %v538 = vadd.f32 %v372, %v537
    %539 = vmatmul.f32.gmra.mxu0 %v285
    %v540 = vpop.f32.mrf.mxu0
    %v541 = vadd.f32 %v372, %v540
    %542 = vmatmul.f32.gmra.mxu0 %v287
    %v543 = vpop.f32.mrf.mxu0
    %v544 = vadd.f32 %v372, %v543
    %545 = vmatmul.f32.gmra.mxu0 %v289
    %v546 = vpop.f32.mrf.mxu0
    %v547 = vadd.f32 %v372, %v546
    %548 = vmatmul.f32.gmra.mxu0 %v291
    %v549 = vpop.f32.mrf.mxu0
    %v550 = vadd.f32 %v372, %v549
    %551 = vmatmul.f32.gmra.mxu0 %v293
    %v552 = vpop.f32.mrf.mxu0
    %v553 = vadd.f32 %v372, %v552
    %554 = vmatmul.f32.gmra.mxu0 %v295
    %v555 = vpop.f32.mrf.mxu0
    %v556 = vadd.f32 %v372, %v555
    %557 = vmatmul.f32.gmra.mxu0 %v297
    %v558 = vpop.f32.mrf.mxu0
    %v559 = vadd.f32 %v372, %v558
    %560 = vmatmul.f32.gmra.mxu0 %v299
    %v561 = vpop.f32.mrf.mxu0
    %v562 = vadd.f32 %v372, %v561
    %563 = vmatmul.f32.gmra.mxu0 %v301
    %v564 = vpop.f32.mrf.mxu0
    %v565 = vadd.f32 %v372, %v564
    %566 = vmatmul.f32.gmra.mxu0 %v303
    %v567 = vpop.f32.mrf.mxu0
    %v568 = vadd.f32 %v372, %v567
    %569 = vdwg.mxu0
    %570 = vmatpush.msra.mxu0 %v368
    %571 = vmatpush.msra.mxu0 %v366
    %572 = vmatpush.msra.mxu0 %v364
    %573 = vmatpush.msra.mxu0 %v362
    %574 = vmatpush.msra.mxu0 %v360
    %575 = vmatpush.msra.mxu0 %v358
    %576 = vmatpush.msra.mxu0 %v356
    %577 = vmatpush.msra.mxu0 %v354
    %578 = vmatpush.msra.mxu0 %v352
    %579 = vmatpush.msra.mxu0 %v350
    %580 = vmatpush.msra.mxu0 %v348
    %581 = vmatpush.msra.mxu0 %v346
    %582 = vmatpush.msra.mxu0 %v344
    %583 = vmatpush.msra.mxu0 %v342
    %584 = vmatpush.msra.mxu0 %v340
    %585 = vmatpush.msra.mxu0 %v338
    %586 = vmatmul.f32.gmra.mxu0 %v274
    %v587 = vpop.f32.mrf.mxu0
    %v588 = vadd.f32 %v523, %v587
    %589 = vmatmul.f32.gmra.mxu0 %v276
    %v590 = vpop.f32.mrf.mxu0
    %v591 = vadd.f32 %v526, %v590
    %592 = vmatmul.f32.gmra.mxu0 %v278
    %v593 = vpop.f32.mrf.mxu0
    %v594 = vadd.f32 %v529, %v593
    %595 = vmatmul.f32.gmra.mxu0 %v280
    %v596 = vpop.f32.mrf.mxu0
    %v597 = vadd.f32 %v532, %v596
    %598 = vmatmul.f32.gmra.mxu0 %v282
    %v599 = vpop.f32.mrf.mxu0
    %v600 = vadd.f32 %v535, %v599
    %601 = vmatmul.f32.gmra.mxu0 %v284
    %v602 = vpop.f32.mrf.mxu0
    %v603 = vadd.f32 %v538, %v602
    %604 = vmatmul.f32.gmra.mxu0 %v286
    %v605 = vpop.f32.mrf.mxu0
    %v606 = vadd.f32 %v541, %v605
    %607 = vmatmul.f32.gmra.mxu0 %v288
    %v608 = vpop.f32.mrf.mxu0
    %v609 = vadd.f32 %v544, %v608
    %610 = vmatmul.f32.gmra.mxu0 %v290
    %v611 = vpop.f32.mrf.mxu0
    %v612 = vadd.f32 %v547, %v611
    %613 = vmatmul.f32.gmra.mxu0 %v292
    %v614 = vpop.f32.mrf.mxu0
    %v615 = vadd.f32 %v550, %v614
    %616 = vmatmul.f32.gmra.mxu0 %v294
    %v617 = vpop.f32.mrf.mxu0
    %v618 = vadd.f32 %v553, %v617
    %619 = vmatmul.f32.gmra.mxu0 %v296
    %v620 = vpop.f32.mrf.mxu0
    %v621 = vadd.f32 %v556, %v620
    %622 = vmatmul.f32.gmra.mxu0 %v298
    %v623 = vpop.f32.mrf.mxu0
    %v624 = vadd.f32 %v559, %v623
    %625 = vmatmul.f32.gmra.mxu0 %v300
    %v626 = vpop.f32.mrf.mxu0
    %v627 = vadd.f32 %v562, %v626
    %628 = vmatmul.f32.gmra.mxu0 %v302
    %v629 = vpop.f32.mrf.mxu0
    %v630 = vadd.f32 %v565, %v629
    %631 = vmatmul.f32.gmra.mxu0 %v304
    %v632 = vpop.f32.mrf.mxu0
    %v633 = vadd.f32 %v568, %v632
    %634 = vdwg.mxu0
    %v635 = vmax.f32 %v458, 0.0
    %v636 = vmax.f32 %v588, 0.0
    %v637 = vmax.f32 %v461, 0.0
    %v638 = vmax.f32 %v591, 0.0
    %v639 = vmax.f32 %v464, 0.0
    %v640 = vmax.f32 %v594, 0.0
    %v641 = vmax.f32 %v467, 0.0
    %v642 = vmax.f32 %v597, 0.0
    %v643 = vmax.f32 %v470, 0.0
    %v644 = vmax.f32 %v600, 0.0
    %v645 = vmax.f32 %v473, 0.0
    %v646 = vmax.f32 %v603, 0.0
    %v647 = vmax.f32 %v476, 0.0
    %v648 = vmax.f32 %v606, 0.0
    %v649 = vmax.f32 %v479, 0.0
    %v650 = vmax.f32 %v609, 0.0
    %v651 = vmax.f32 %v482, 0.0
    %v652 = vmax.f32 %v612, 0.0
    %v653 = vmax.f32 %v485, 0.0
    %v654 = vmax.f32 %v615, 0.0
    %v655 = vmax.f32 %v488, 0.0
    %v656 = vmax.f32 %v618, 0.0
    %v657 = vmax.f32 %v491, 0.0
    %v658 = vmax.f32 %v621, 0.0
    %v659 = vmax.f32 %v494, 0.0
    %v660 = vmax.f32 %v624, 0.0
    %v661 = vmax.f32 %v497, 0.0
    %v662 = vmax.f32 %v627, 0.0
    %v663 = vmax.f32 %v500, 0.0
    %v664 = vmax.f32 %v630, 0.0
    %v665 = vmax.f32 %v503, 0.0
    %v666 = vmax.f32 %v633, 0.0
    %v667 = vld [vmem:[#allocation5] sm:$0xff]
    %v668 = vld [vmem:[#allocation5 + $0x8] sm:$0xff]
    %v669 = vld [vmem:[#allocation5 + $0x10] sm:$0xff]
    %v670 = vld [vmem:[#allocation5 + $0x18] sm:$0xff]
    %v671 = vld [vmem:[#allocation5 + $0x20] sm:$0xff]
    %v672 = vld [vmem:[#allocation5 + $0x28] sm:$0xff]
    %v673 = vld [vmem:[#allocation5 + $0x30] sm:$0xff]
    %v674 = vld [vmem:[#allocation5 + $0x38] sm:$0xff]
    %v675 = vld [vmem:[#allocation5 + $0x40] sm:$0xff]
    %v676 = vld [vmem:[#allocation5 + $0x48] sm:$0xff]
    %v677 = vld [vmem:[#allocation5 + $0x50] sm:$0xff]
    %v678 = vld [vmem:[#allocation5 + $0x58] sm:$0xff]
    %v679 = vld [vmem:[#allocation5 + $0x60] sm:$0xff]
    %v680 = vld [vmem:[#allocation5 + $0x68] sm:$0xff]
    %v681 = vld [vmem:[#allocation5 + $0x70] sm:$0xff]
    %v682 = vld [vmem:[#allocation5 + $0x78] sm:$0xff]
    %v683 = vld [vmem:[#allocation5 + $0x80] sm:$0xff]
    %v684 = vld [vmem:[#allocation5 + $0x88] sm:$0xff]
    %v685 = vld [vmem:[#allocation5 + $0x90] sm:$0xff]
    %v686 = vld [vmem:[#allocation5 + $0x98] sm:$0xff]
    %v687 = vld [vmem:[#allocation5 + $0xa0] sm:$0xff]
    %v688 = vld [vmem:[#allocation5 + $0xa8] sm:$0xff]
    %v689 = vld [vmem:[#allocation5 + $0xb0] sm:$0xff]
    %v690 = vld [vmem:[#allocation5 + $0xb8] sm:$0xff]
    %v691 = vld [vmem:[#allocation5 + $0xc0] sm:$0xff]
    %v692 = vld [vmem:[#allocation5 + $0xc8] sm:$0xff]
    %v693 = vld [vmem:[#allocation5 + $0xd0] sm:$0xff]
    %v694 = vld [vmem:[#allocation5 + $0xd8] sm:$0xff]
    %v695 = vld [vmem:[#allocation5 + $0xe0] sm:$0xff]
    %v696 = vld [vmem:[#allocation5 + $0xe8] sm:$0xff]
    %v697 = vld [vmem:[#allocation5 + $0xf0] sm:$0xff]
    %v698 = vld [vmem:[#allocation5 + $0xf8] sm:$0xff]
    %v699 = vld [vmem:[%s6] sm:$0x1]
    %v701 = vperm.slane %v699, 0
    %703 = vmatpush.msra.mxu0 %v682
    %704 = vmatpush.msra.mxu0 %v681
    %705 = vmatpush.msra.mxu0 %v680
    %706 = vmatpush.msra.mxu0 %v679
    %707 = vmatpush.msra.mxu0 %v678
    %708 = vmatpush.msra.mxu0 %v677
    %709 = vmatpush.msra.mxu0 %v676
    %710 = vmatpush.msra.mxu0 %v675
    %711 = vmatpush.msra.mxu0 %v674
    %712 = vmatpush.msra.mxu0 %v673
    %713 = vmatpush.msra.mxu0 %v672
    %714 = vmatpush.msra.mxu0 %v671
    %715 = vmatpush.msra.mxu0 %v670
    %716 = vmatpush.msra.mxu0 %v669
    %717 = vmatpush.msra.mxu0 %v668
    %718 = vmatpush.msra.mxu0 %v667
    %719 = vmatmul.f32.gmra.mxu0 %v635
    %v720 = vpop.f32.mrf.mxu0
    %v721 = vadd.f32 %v701, %v720
    %722 = vmatmul.f32.gmra.mxu0 %v637
    %v723 = vpop.f32.mrf.mxu0
    %v724 = vadd.f32 %v701, %v723
    %725 = vmatmul.f32.gmra.mxu0 %v639
    %v726 = vpop.f32.mrf.mxu0
    %v727 = vadd.f32 %v701, %v726
    %728 = vmatmul.f32.gmra.mxu0 %v641
    %v729 = vpop.f32.mrf.mxu0
    %v730 = vadd.f32 %v701, %v729
    %731 = vmatmul.f32.gmra.mxu0 %v643
    %v732 = vpop.f32.mrf.mxu0
    %v733 = vadd.f32 %v701, %v732
    %734 = vmatmul.f32.gmra.mxu0 %v645
    %v735 = vpop.f32.mrf.mxu0
    %v736 = vadd.f32 %v701, %v735
    %737 = vmatmul.f32.gmra.mxu0 %v647
    %v738 = vpop.f32.mrf.mxu0
    %v739 = vadd.f32 %v701, %v738
    %740 = vmatmul.f32.gmra.mxu0 %v649
    %v741 = vpop.f32.mrf.mxu0
    %v742 = vadd.f32 %v701, %v741
    %743 = vmatmul.f32.gmra.mxu0 %v651
    %v744 = vpop.f32.mrf.mxu0
    %v745 = vadd.f32 %v701, %v744
    %746 = vmatmul.f32.gmra.mxu0 %v653
    %v747 = vpop.f32.mrf.mxu0
    %v748 = vadd.f32 %v701, %v747
    %749 = vmatmul.f32.gmra.mxu0 %v655
    %v750 = vpop.f32.mrf.mxu0
    %v751 = vadd.f32 %v701, %v750
    %752 = vmatmul.f32.gmra.mxu0 %v657
    %v753 = vpop.f32.mrf.mxu0
    %v754 = vadd.f32 %v701, %v753
    %755 = vmatmul.f32.gmra.mxu0 %v659
    %v756 = vpop.f32.mrf.mxu0
    %v757 = vadd.f32 %v701, %v756
    %758 = vmatmul.f32.gmra.mxu0 %v661
    %v759 = vpop.f32.mrf.mxu0
    %v760 = vadd.f32 %v701, %v759
    %761 = vmatmul.f32.gmra.mxu0 %v663
    %v762 = vpop.f32.mrf.mxu0
    %v763 = vadd.f32 %v701, %v762
    %764 = vmatmul.f32.gmra.mxu0 %v665
    %v765 = vpop.f32.mrf.mxu0
    %v766 = vadd.f32 %v701, %v765
    %767 = vdwg.mxu0
    %768 = vmatpush.msra.mxu0 %v698
    %769 = vmatpush.msra.mxu0 %v697
    %770 = vmatpush.msra.mxu0 %v696
    %771 = vmatpush.msra.mxu0 %v695
    %772 = vmatpush.msra.mxu0 %v694
    %773 = vmatpush.msra.mxu0 %v693
    %774 = vmatpush.msra.mxu0 %v692
    %775 = vmatpush.msra.mxu0 %v691
    %776 = vmatpush.msra.mxu0 %v690
    %777 = vmatpush.msra.mxu0 %v689
    %778 = vmatpush.msra.mxu0 %v688
    %779 = vmatpush.msra.mxu0 %v687
    %780 = vmatpush.msra.mxu0 %v686
    %781 = vmatpush.msra.mxu0 %v685
    %782 = vmatpush.msra.mxu0 %v684
    %783 = vmatpush.msra.mxu0 %v683
    %784 = vmatmul.f32.gmra.mxu0 %v636
    %v785 = vpop.f32.mrf.mxu0
    %v786 = vadd.f32 %v721, %v785
    %787 = vmatmul.f32.gmra.mxu0 %v638
    %v788 = vpop.f32.mrf.mxu0
    %v789 = vadd.f32 %v724, %v788
    %790 = vmatmul.f32.gmra.mxu0 %v640
    %v791 = vpop.f32.mrf.mxu0
    %v792 = vadd.f32 %v727, %v791
    %793 = vmatmul.f32.gmra.mxu0 %v642
    %v794 = vpop.f32.mrf.mxu0
    %v795 = vadd.f32 %v730, %v794
    %796 = vmatmul.f32.gmra.mxu0 %v644
    %v797 = vpop.f32.mrf.mxu0
    %v798 = vadd.f32 %v733, %v797
    %799 = vmatmul.f32.gmra.mxu0 %v646
    %v800 = vpop.f32.mrf.mxu0
    %v801 = vadd.f32 %v736, %v800
    %802 = vmatmul.f32.gmra.mxu0 %v648
    %v803 = vpop.f32.mrf.mxu0
    %v804 = vadd.f32 %v739, %v803
    %805 = vmatmul.f32.gmra.mxu0 %v650
    %v806 = vpop.f32.mrf.mxu0
    %v807 = vadd.f32 %v742, %v806
    %808 = vmatmul.f32.gmra.mxu0 %v652
    %v809 = vpop.f32.mrf.mxu0
    %v810 = vadd.f32 %v745, %v809
    %811 = vmatmul.f32.gmra.mxu0 %v654
    %v812 = vpop.f32.mrf.mxu0
    %v813 = vadd.f32 %v748, %v812
    %814 = vmatmul.f32.gmra.mxu0 %v656
    %v815 = vpop.f32.mrf.mxu0
    %v816 = vadd.f32 %v751, %v815
    %817 = vmatmul.f32.gmra.mxu0 %v658
    %v818 = vpop.f32.mrf.mxu0
    %v819 = vadd.f32 %v754, %v818
    %820 = vmatmul.f32.gmra.mxu0 %v660
    %v821 = vpop.f32.mrf.mxu0
    %v822 = vadd.f32 %v757, %v821
    %823 = vmatmul.f32.gmra.mxu0 %v662
    %v824 = vpop.f32.mrf.mxu0
    %v825 = vadd.f32 %v760, %v824
    %826 = vmatmul.f32.gmra.mxu0 %v664
    %v827 = vpop.f32.mrf.mxu0
    %v828 = vadd.f32 %v763, %v827
    %829 = vmatmul.f32.gmra.mxu0 %v666
    %v830 = vpop.f32.mrf.mxu0
    %v831 = vadd.f32 %v766, %v830
    %832 = vdwg.mxu0
    %v833 = vtanh.pop %v786
    %v834 = vtanh.pop %v789
    %v835 = vtanh.pop %v792
    %v836 = vtanh.pop %v795
    %v837 = vtanh.pop %v798
    %v838 = vtanh.pop %v801
    %v839 = vtanh.pop %v804
    %v840 = vtanh.pop %v807
    %v841 = vtanh.pop %v810
    %v842 = vtanh.pop %v813
    %v843 = vtanh.pop %v816
    %v844 = vtanh.pop %v819
    %v845 = vtanh.pop %v822
    %v846 = vtanh.pop %v825
    %v847 = vtanh.pop %v828
    %v848 = vtanh.pop %v831
    %v849 = vmul.f32 %v833, 2.0
    %v850 = vmul.f32 %v834, 2.0
    %v851 = vmul.f32 %v835, 2.0
    %v852 = vmul.f32 %v836, 2.0
    %v853 = vmul.f32 %v837, 2.0
    %v854 = vmul.f32 %v838, 2.0
    %v855 = vmul.f32 %v839, 2.0
    %v856 = vmul.f32 %v840, 2.0
    %v857 = vmul.f32 %v841, 2.0
    %v858 = vmul.f32 %v842, 2.0
    %v859 = vmul.f32 %v843, 2.0
    %v860 = vmul.f32 %v844, 2.0
    %v861 = vmul.f32 %v845, 2.0
    %v862 = vmul.f32 %v846, 2.0
    %v863 = vmul.f32 %v847, 2.0
    %v864 = vmul.f32 %v848, 2.0
    %865 = vst [vmem:[#allocation7] sm:$0xff] %v849
    %866 = vst [vmem:[#allocation7 + $0x8] sm:$0xff] %v850
    %867 = vst [vmem:[#allocation7 + $0x10] sm:$0xff] %v851
    %868 = vst [vmem:[#allocation7 + $0x18] sm:$0xff] %v852
    %869 = vst [vmem:[#allocation7 + $0x20] sm:$0xff] %v853
    %870 = vst [vmem:[#allocation7 + $0x28] sm:$0xff] %v854
    %871 = vst [vmem:[#allocation7 + $0x30] sm:$0xff] %v855
    %872 = vst [vmem:[#allocation7 + $0x38] sm:$0xff] %v856
    %873 = vst [vmem:[#allocation7 + $0x40] sm:$0xff] %v857
    %874 = vst [vmem:[#allocation7 + $0x48] sm:$0xff] %v858
    %875 = vst [vmem:[#allocation7 + $0x50] sm:$0xff] %v859
    %876 = vst [vmem:[#allocation7 + $0x58] sm:$0xff] %v860
    %877 = vst [vmem:[#allocation7 + $0x60] sm:$0xff] %v861
    %878 = vst [vmem:[#allocation7 + $0x68] sm:$0xff] %v862
    %879 = vst [vmem:[#allocation7 + $0x70] sm:$0xff] %v863
    %880 = vst [vmem:[#allocation7 + $0x78] sm:$0xff] %v864
    // Predicated region
    $region38: #{tpu_custom_call.1} parent=1 // pred_check
      _
    $region39: #{tpu_custom_call.1} parent=1 // pred_check_branch
      %882 = sbr.rel (0) target = $region41
    $region40: #{tpu_custom_call.1} parent=1 // pred_region
      %884 = vsyncadd [#allocation4], 0
      %s885 = sshll.u32 [#allocation7], 4
      %s886 = int_to_ptr.vmem [resolvable:$true] %s885
      %s887 = sshll.u32 %s7, 4
      %s888 = int_to_ptr.hbm [resolvable:$true] %s887
      %893 = dma.vmem_to_hbm [thread:$0]  %s886, 2048, %s888, [#allocation4], 128, 128, 8
    $region41: #{tpu_custom_call.1} parent=1 // pred_fallthru
      _
    // Predicated region
    $region42: #{tpu_custom_call.1} parent=1 // pred_check
      _
    $region43: #{tpu_custom_call.1} parent=1 // pred_check_branch
      %895 = sbr.rel (0) target = $region45
    $region44: #{tpu_custom_call.1} parent=1 // pred_region
      %897 = dma.done [#allocation4], 2048
    $region45: #{tpu_custom_call.1} parent=1 // pred_fallthru
      _
    %898 = vsyncpa [#allocation3], 1
    %899 = vsyncpa [#allocation6], 1
    %900 = vsyncpa [#allocation4], 1

</llo_original>
